<compile_context>
chip_gen: v7x
topology: tpu7x:2x2x1
jax: 0.10.0
libtpu: 0.0.40
codegen_flags: <defaults>
</compile_context>

<pallas_src>
import functools

import jax
import jax.numpy as jnp
from jax.experimental import pallas as pl
from jax.experimental.pallas import tpu as pltpu

_BN_EPS = 1e-5
_LANES = 128


def _round_up(x, m):
    return (x + m - 1) // m * m


def _vmem_budget_bytes():
    """Per-generation VMEM budget (v7x: 64 MiB/TC, v5e/v6e: 128 MiB)."""
    cap = 64 * 1024 * 1024
    try:
        cap = int(getattr(pltpu.get_tpu_info(), "vmem_capacity_bytes", cap))
    except Exception:
        pass
    return min(int(cap * 0.6), 96 * 1024 * 1024)


def _auto_target_rows(cp_in, cp_out, budget):
    # ~32*C live VMEM bytes per row per stage (double-buffered bf16 tiles,
    # bf16 taps, f32 temps); keep half the budget as pipelining headroom.
    per_row = 32 * max(cp_in, cp_out)
    rows = (budget // 2) // per_row
    return max(256, min(4096, rows // 8 * 8))


def _seqs_per_tile(n_seq, rows_per_seq, target_rows):
    """Largest #sequences/tile dividing n_seq with spt*rows_per_seq <= target
    (rows_per_seq is already 8-aligned). Falls back to 1, never the full array."""
    best = 1
    for d in range(1, n_seq + 1):
        if n_seq % d == 0 and d * rows_per_seq <= target_rows:
            best = d
    return best


# ----------------------------- kernel helpers -------------------------------

def _valid_mask(rows, l_out, l_pad):
    # (rows, 1) f32 mask of the real (non length-padded) rows.
    pos = jax.lax.broadcasted_iota(jnp.int32, (rows, 1), 0) % l_pad
    return (pos < l_out).astype(jnp.float32)


def _conv3_taps(h32, hb, l_out, l_pad):
    """Fused-K taps (rows, 3*C) bf16 for a ksize=3 pad=1 stride=1 conv.

    h32: f32 activations (rolled + edge-masked), hb: the same values in bf16
    used directly as the center tap. Tiles hold whole (row-padded) sequences,
    so the sublane roll never mixes tiles; sequence-edge taps are masked.
    Each tap is cast to bf16 individually — no f32 (rows, 3C) concat.
    """
    rows = h32.shape[0]
    pos = jax.lax.broadcasted_iota(jnp.int32, (rows, 1), 0) % l_pad
    m0 = (pos != 0).astype(jnp.float32)
    m2 = (pos != l_out - 1).astype(jnp.float32)
    t0 = (pltpu.roll(h32, shift=1, axis=0) * m0).astype(jnp.bfloat16)
    t2 = (pltpu.roll(h32, shift=rows - 1, axis=0) * m2).astype(jnp.bfloat16)
    return jnp.concatenate([t0, hb, t2], axis=1)


# ------------------------------- kernels -------------------------------------

def _stage1_kernel(*args, l_out, l_pad, cp_in, has_downsample, use_roll, mask_rows):
    # conv1 raw (+ 1x1 downsample conv raw), bf16 outputs, per-tile f32 stats.
    if has_downsample:
        (x_ref, w1_ref, wd_ref,
         h1_ref, idn_ref, s1_ref, q1_ref, sd_ref, qd_ref) = args
    else:
        x_ref, w1_ref, h1_ref, s1_ref, q1_ref = args

    x = x_ref[...]                                   # bf16
    if use_roll:
        x32 = x.astype(jnp.float32)
        taps = _conv3_taps(x32, x, l_out, l_pad)     # bf16 (rows, 3*cp_in)
        xc = x                                       # center tap == x
    else:
        taps = x                                     # host im2col (stride > 1)
        xc = x[:, cp_in:2 * cp_in]                   # center tap == strided x

    h1 = jnp.dot(taps, w1_ref[...], preferred_element_type=jnp.float32)
    h1_ref[...] = h1.astype(jnp.bfloat16)

    if mask_rows:
        valid = _valid_mask(h1.shape[0], l_out, l_pad)
        h1s = h1 * valid
    else:
        h1s = h1
    s1_ref[...] = jnp.sum(h1s, axis=0, keepdims=True).reshape(s1_ref.shape)
    q1_ref[...] = jnp.sum(h1s * h1, axis=0, keepdims=True).reshape(q1_ref.shape)

    if has_downsample:
        idn = jnp.dot(xc, wd_ref[...], preferred_element_type=jnp.float32)
        idn_ref[...] = idn.astype(jnp.bfloat16)
        idns = idn * valid if mask_rows else idn
        sd_ref[...] = jnp.sum(idns, axis=0, keepdims=True).reshape(sd_ref.shape)
        qd_ref[...] = jnp.sum(idns * idn, axis=0, keepdims=True).reshape(qd_ref.shape)


def _stage2_kernel(h1_ref, a1_ref, c1_ref, w2_ref, o2_ref, s2_ref, q2_ref,
                   *, l_out, l_pad, mask_rows):
    # bn1 (scale/shift, f32) + relu + conv2 raw (bf16 out), per-tile f32 stats.
    h = jnp.maximum(h1_ref[...].astype(jnp.float32) * a1_ref[...] + c1_ref[...], 0.0)
    taps = _conv3_taps(h, h.astype(jnp.bfloat16), l_out, l_pad)
    o = jnp.dot(taps, w2_ref[...], preferred_element_type=jnp.float32)
    o2_ref[...] = o.astype(jnp.bfloat16)

    if mask_rows:
        valid = _valid_mask(o.shape[0], l_out, l_pad)
        os_ = o * valid
    else:
        os_ = o
    s2_ref[...] = jnp.sum(os_, axis=0, keepdims=True).reshape(s2_ref.shape)
    q2_ref[...] = jnp.sum(os_ * o, axis=0, keepdims=True).reshape(q2_ref.shape)


# -------------------------------- wrapper ------------------------------------

def residual_block_forward(x, params, stride=1, *, target_rows_per_tile=None):
    """x: (N, Cin, L) float32 (PyTorch NCL). Returns (N, Cout, L_out) float32."""
    n, cin, l = x.shape
    cout = params["w1"].shape[0]
    l_out = (l - 1) // stride + 1
    l_pad = _round_up(l_out, 8)                      # per-sequence row padding
    mask_rows = l_pad != l_out
    m_true = n * l_out                               # true #elements for BN stats
    cp_in = _round_up(cin, _LANES)
    cp_out = _round_up(cout, _LANES)

    has_downsample = cin != cout
    use_roll = stride == 1
    if not has_downsample:
        assert stride == 1, "identity shortcut requires stride=1 (as in PyTorch)"

    f32, bf16 = jnp.float32, jnp.bfloat16

    # ---------- host-side layout glue (channel-last, pad rows & channels) ----
    def to_rows(a_ncl, c_pad):                       # (N, C, L') -> (N*l_pad, c_pad)
        a = a_ncl.transpose(0, 2, 1)
        a = jnp.pad(a, ((0, 0), (0, l_pad - a.shape[1]), (0, c_pad - a.shape[-1])))
        return a.reshape(-1, c_pad).astype(bf16)

    if use_roll:
        x_rows = to_rows(x, cp_in)                   # (M_pad, cp_in) -- single copy
        x_lanes = cp_in
    else:   # stride > 1: im2col on the host (taps are strided gathers)
        x_p = jnp.pad(x, ((0, 0), (0, 0), (1, 1)))
        taps = [x_p[:, :, k:k + stride * (l_out - 1) + 1:stride] for k in range(3)]
        x_rows = jnp.concatenate([to_rows(t, cp_in) for t in taps], axis=-1)
        x_lanes = 3 * cp_in

    def row(v):                                      # (C,) -> (1, cp_out) f32
        return jnp.pad(v.astype(f32), (0, cp_out - v.shape[0])).reshape(1, cp_out)

    # conv weights -> (3*C_in_p, C_out_p) bf16, k-major rows (matches tap order).
    # Conv biases are dropped: every conv feeds a batch-stats BN which cancels
    # per-channel biases exactly.
    w1 = params["w1"].astype(f32).transpose(2, 1, 0)               # (3, Cin, Cout)
    w1 = jnp.pad(w1, ((0, 0), (0, cp_in - cin), (0, cp_out - cout)))
    w1 = w1.reshape(3 * cp_in, cp_out).astype(bf16)
    w2 = params["w2"].astype(f32).transpose(2, 1, 0)               # (3, Cout, Cout)
    w2 = jnp.pad(w2, ((0, 0), (0, cp_out - cout), (0, cp_out - cout)))
    w2 = w2.reshape(3 * cp_out, cp_out).astype(bf16)

    # ------------------------------ tiling ----------------------------------
    vmem_budget = _vmem_budget_bytes()
    if target_rows_per_tile is None:
        target_rows_per_tile = _auto_target_rows(cp_in, cp_out, vmem_budget)
    spt = _seqs_per_tile(n, l_pad, target_rows_per_tile)
    tile_m = spt * l_pad
    num_tiles = n // spt
    m_pad = n * l_pad

    tiled = lambda lanes: pl.BlockSpec((tile_m, lanes), lambda i: (i, 0))
    whole = lambda shape: pl.BlockSpec(shape, lambda i: (0,) * len(shape))
    stats_shape = jax.ShapeDtypeStruct((num_tiles, 1, cp_out), f32)
    stats_spec = pl.BlockSpec((1, 1, cp_out), lambda i: (i, 0, 0))

    # Stats are per-tile partials -> no cross-tile state -> both grids are
    # "parallel" (shards row tiles across both TensorCores on v7x).
    cparams = pltpu.CompilerParams(dimension_semantics=("parallel",),
                                   vmem_limit_bytes=vmem_budget)

    # --------------------------- stage 1 -------------------------------------
    inputs1 = [x_rows, w1]
    in_specs1 = [tiled(x_lanes), whole((3 * cp_in, cp_out))]
    out_shapes1 = [jax.ShapeDtypeStruct((m_pad, cp_out), bf16)]        # h1 raw
    out_specs1 = [tiled(cp_out)]
    if has_downsample:
        # TODO(synk): on v6e/v7x with cp_out == 128 the 1x1 downsample matmul
        # could be fused into the conv1 matmul along N (N=256 fills the MXU).
        wd = params["wd"][:, :, 0].astype(f32).T                       # (Cin, Cout)
        wd = jnp.pad(wd, ((0, cp_in - cin), (0, cp_out - cout))).astype(bf16)
        inputs1 += [wd]
        in_specs1 += [whole((cp_in, cp_out))]
        out_shapes1 += [jax.ShapeDtypeStruct((m_pad, cp_out), bf16)]   # idn raw
        out_specs1 += [tiled(cp_out)]
    n_stats1 = 4 if has_downsample else 2                              # s1,q1[,sd,qd]
    out_shapes1 += [stats_shape] * n_stats1
    out_specs1 += [stats_spec] * n_stats1

    res1 = pl.pallas_call(
        functools.partial(_stage1_kernel, l_out=l_out, l_pad=l_pad, cp_in=cp_in,
                          has_downsample=has_downsample, use_roll=use_roll,
                          mask_rows=mask_rows),
        grid=(num_tiles,),
        in_specs=in_specs1, out_specs=out_specs1, out_shape=out_shapes1,
        compiler_params=cparams,
    )(*inputs1)
    if has_downsample:
        h1_raw, idn_raw, s1, q1, sd, qd = res1
    else:
        h1_raw, s1, q1 = res1

    # per-channel scale/shift from the per-tile partial sums (tiny (1,C) glue)
    def affine(s_part, q_part, gamma, beta):
        s = jnp.sum(s_part, axis=0)                                    # (1, cp_out)
        q = jnp.sum(q_part, axis=0)
        mean = s / m_true
        # TODO(synk): q/m - mean^2 can cancel for very large M / large means;
        # switch to a shifted sumsq or two-pass variance if that regime matters.
        var = jnp.maximum(q / m_true - mean * mean, 0.0)               # biased var
        scale = row(gamma) * jax.lax.rsqrt(var + _BN_EPS)
        return scale, row(beta) - mean * scale

    a1, c1 = affine(s1, q1, params["g1"], params["be1"])

    # --------------------------- stage 2 -------------------------------------
    o2_raw, s2, q2 = pl.pallas_call(
        functools.partial(_stage2_kernel, l_out=l_out, l_pad=l_pad,
                          mask_rows=mask_rows),
        grid=(num_tiles,),
        in_specs=[tiled(cp_out), whole((1, cp_out)), whole((1, cp_out)),
                  whole((3 * cp_out, cp_out))],
        out_specs=[tiled(cp_out), stats_spec, stats_spec],
        out_shape=[jax.ShapeDtypeStruct((m_pad, cp_out), bf16),
                   stats_shape, stats_shape],
        compiler_params=cparams,
    )(h1_raw, a1, c1, w2)

    a2, c2 = affine(s2, q2, params["g2"], params["be2"])

    # ------------------ fused epilogue (plain jnp, XLA-fused) ----------------
    # bn2 + shortcut + add + relu + un-pad/transpose in one XLA fusion: no
    # separate elementwise pallas stage, no extra HBM round trip.
    o = o2_raw.astype(f32) * a2 + c2
    if has_downsample:
        ad, cd = affine(sd, qd, params["gd"], params["bed"])
        idn = idn_raw.astype(f32) * ad + cd
    else:
        idn = x_rows.astype(f32)        # identity shortcut: reuse the bf16 copy
    out2d = jnp.maximum(o + idn, 0.0)
    # TODO(synk): when chaining blocks, keep activations channel-last and fuse
    # this epilogue into the next block's stage-1 kernel instead.
    return out2d.reshape(n, l_pad, cp_out)[:, :l_out, :cout].transpose(0, 2, 1)


# -------------------------- params / reference -------------------------------

def init_params(key, cin, cout):
    ks = jax.random.split(key, 6)

    def conv_init(k, shape, fan_in):
        bound = 1.0 / (fan_in ** 0.5)
        return jax.random.uniform(k, shape, jnp.float32, -bound, bound)

    params = {
        "w1": conv_init(ks[0], (cout, cin, 3), cin * 3),
        "b1": conv_init(ks[1], (cout,), cin * 3),
        "g1": jnp.ones((cout,), jnp.float32), "be1": jnp.zeros((cout,), jnp.float32),
        "w2": conv_init(ks[2], (cout, cout, 3), cout * 3),
        "b2": conv_init(ks[3], (cout,), cout * 3),
        "g2": jnp.ones((cout,), jnp.float32), "be2": jnp.zeros((cout,), jnp.float32),
    }
    if cin != cout:
        params.update({
            "wd": conv_init(ks[4], (cout, cin, 1), cin),
            "bd": conv_init(ks[5], (cout,), cin),
            "gd": jnp.ones((cout,), jnp.float32), "bed": jnp.zeros((cout,), jnp.float32),
        })
    return params


def _reference(x, params, stride=1):
    """Pure-JAX (f32) reference of the PyTorch forward (training-mode BN).
    Uses the conv biases; the kernel drops them (BN cancels them exactly)."""
    dn = ("NCH", "OIH", "NCH")

    def conv(h, w, b, s, pad):
        o = jax.lax.conv_general_dilated(h, w, (s,), [(pad, pad)],
                                         dimension_numbers=dn)
        return o + b[None, :, None]

    def bn(h, g, b):
        mean = h.mean(axis=(0, 2), keepdims=True)
        var = ((h - mean) ** 2).mean(axis=(0, 2), keepdims=True)
        return (h - mean) * jax.lax.rsqrt(var + _BN_EPS) * g[None, :, None] \
            + b[None, :, None]

    cin, cout = x.shape[1], params["w1"].shape[0]
    if cin != cout:
        identity = bn(conv(x, params["wd"], params["bd"], stride, 0),
                      params["gd"], params["bed"])
    else:
        identity = x
    out = jnp.maximum(bn(conv(x, params["w1"], params["b1"], stride, 1),
                         params["g1"], params["be1"]), 0.0)
    out = bn(conv(out, params["w2"], params["b2"], 1, 1),
             params["g2"], params["be2"])
    return jnp.maximum(out + identity, 0.0)


# ---------------------------------- main --------------------------------------

if __name__ == "__main__":
    key = jax.random.PRNGKey(0)
    k_x, k_p = jax.random.split(key)
    # bf16 MXU operands + bf16 inter-stage activations (f32 accumulate/stats);
    # compare against the f32 reference with a bf16-appropriate tolerance.
    TOL = dict(rtol=3e-2, atol=3e-2)

    # case 1: downsample shortcut, stride 1; tiny tile target so the multi-tile
    # grid + per-tile partial BN statistics path is actually exercised.
    N, CIN, COUT, L = 2, 4, 8, 16
    x = jax.random.normal(k_x, (N, CIN, L), jnp.float32)
    params = init_params(k_p, CIN, COUT)
    out = jax.block_until_ready(
        residual_block_forward(x, params, stride=1, target_rows_per_tile=16))
    ref = jax.block_until_ready(_reference(x, params, stride=1))
    assert out.shape == ref.shape == (N, COUT, L)
    assert jnp.allclose(out, ref, **TOL), \
        f"case1 max abs err {jnp.max(jnp.abs(out - ref))}"

    # case 2: identity shortcut (cin == cout) -- x is reused as the residual.
    params_id = init_params(k_p, COUT, COUT)
    x_id = jax.random.normal(k_x, (N, COUT, L), jnp.float32)
    out = jax.block_until_ready(residual_block_forward(x_id, params_id, stride=1))
    ref = jax.block_until_ready(_reference(x_id, params_id, stride=1))
    assert out.shape == ref.shape == (N, COUT, L)
    assert jnp.allclose(out, ref, **TOL), \
        f"case2 max abs err {jnp.max(jnp.abs(out - ref))}"

    # case 3: strided downsample block (host im2col path for conv1).
    out = jax.block_until_ready(residual_block_forward(x, params, stride=2))
    ref = jax.block_until_ready(_reference(x, params, stride=2))
    assert out.shape == ref.shape == (N, COUT, (L - 1) // 2 + 1)
    assert jnp.allclose(out, ref, **TOL), \
        f"case3 max abs err {jnp.max(jnp.abs(out - ref))}"

    # case 4: length not 8-aligned -> per-sequence row padding + masked stats.
    x_odd = jax.random.normal(k_x, (N, CIN, 12), jnp.float32)
    out = jax.block_until_ready(
        residual_block_forward(x_odd, params, stride=1, target_rows_per_tile=16))
    ref = jax.block_until_ready(_reference(x_odd, params, stride=1))
    assert out.shape == ref.shape == (N, COUT, 12)
    assert jnp.allclose(out, ref, **TOL), \
        f"case4 max abs err {jnp.max(jnp.abs(out - ref))}"

    print("KERNEL_OK")
</pallas_src>

<mosaic_0001>
module attributes {stable_mosaic.version = 11 : i64} {
  func.func @_stage1_kernel(%arg0: i32, %arg1: memref<16x128xbf16, #tpu.memory_space<vmem>>, %arg2: memref<384x128xbf16, #tpu.memory_space<vmem>>, %arg3: memref<128x128xbf16, #tpu.memory_space<vmem>>, %arg4: memref<16x128xbf16, #tpu.memory_space<vmem>>, %arg5: memref<16x128xbf16, #tpu.memory_space<vmem>>, %arg6: memref<1x1x128xf32, #tpu.memory_space<vmem>>, %arg7: memref<1x1x128xf32, #tpu.memory_space<vmem>>, %arg8: memref<1x1x128xf32, #tpu.memory_space<vmem>>, %arg9: memref<1x1x128xf32, #tpu.memory_space<vmem>>) attributes {dimension_semantics = [#tpu.dimension_semantics<parallel>], iteration_bounds = array<i64: 2>, scalar_prefetch = 0 : i64, scratch_operands = 0 : i64, tpu.core_type = #tpu.core_type<tc>, window_params = [{transform_indices = @transform_0, window_bounds = array<i64: 16, 128>}, {pipeline_mode = #tpu.pipeline_mode<synchronous>, transform_indices = @transform_1, window_bounds = array<i64: 384, 128>}, {pipeline_mode = #tpu.pipeline_mode<synchronous>, transform_indices = @transform_2, window_bounds = array<i64: 128, 128>}, {transform_indices = @transform_3, window_bounds = array<i64: 16, 128>}, {transform_indices = @transform_4, window_bounds = array<i64: 16, 128>}, {transform_indices = @transform_5, window_bounds = array<i64: 1, 1, 128>}, {transform_indices = @transform_6, window_bounds = array<i64: 1, 1, 128>}, {transform_indices = @transform_7, window_bounds = array<i64: 1, 1, 128>}, {transform_indices = @transform_8, window_bounds = array<i64: 1, 1, 128>}]} {
    %c0 = arith.constant 0 : index
    %c0_0 = arith.constant 0 : index
    %0 = vector.load %arg1[%c0, %c0_0] : memref<16x128xbf16, #tpu.memory_space<vmem>>, vector<16x128xbf16>
    %1 = arith.extf %0 : vector<16x128xbf16> to vector<16x128xf32>
    %2 = tpu.iota {dimensions = array<i32: 0>} : vector<16x1xi32>
    %c16_i32 = arith.constant 16 : i32
    %c0_i32 = arith.constant 0 : i32
    %3 = arith.cmpi eq, %c16_i32, %c0_i32 : i32
    %c1_i32 = arith.constant 1 : i32
    %4 = arith.select %3, %c1_i32, %c16_i32 : i32
    %5 = vector.broadcast %4 : i32 to vector<16x1xi32>
    %6 = arith.remsi %2, %5 : vector<16x1xi32>
    %c0_i32_1 = arith.constant 0 : i32
    %7 = vector.broadcast %c0_i32_1 : i32 to vector<16x1xi32>
    %8 = arith.cmpi ne, %6, %7 : vector<16x1xi32>
    %c0_i32_2 = arith.constant 0 : i32
    %9 = vector.broadcast %c0_i32_2 : i32 to vector<16x1xi32>
    %10 = arith.cmpi slt, %6, %9 : vector<16x1xi32>
    %c0_i32_3 = arith.constant 0 : i32
    %11 = arith.cmpi slt, %4, %c0_i32_3 : i32
    %12 = vector.broadcast %11 : i1 to vector<16x1xi1>
    %13 = vector.broadcast %12 : vector<16x1xi1> to vector<16x1xi1>
    %14 = arith.xori %10, %13 : vector<16x1xi1>
    %15 = arith.andi %14, %8 : vector<16x1xi1>
    %16 = vector.broadcast %4 : i32 to vector<16x1xi32>
    %17 = arith.addi %6, %16 : vector<16x1xi32>
    %18 = arith.select %15, %17, %6 : vector<16x1xi1>, vector<16x1xi32>
    %c0_i32_4 = arith.constant 0 : i32
    %19 = vector.broadcast %c0_i32_4 : i32 to vector<16x1xi32>
    %20 = arith.cmpi ne, %18, %19 : vector<16x1xi32>
    %21 = arith.extui %20 : vector<16x1xi1> to vector<16x1xi32>
    %22 = arith.sitofp %21 : vector<16x1xi32> to vector<16x1xf32>
    %c15_i32 = arith.constant 15 : i32
    %23 = vector.broadcast %c15_i32 : i32 to vector<16x1xi32>
    %24 = arith.cmpi ne, %18, %23 : vector<16x1xi32>
    %25 = arith.extui %24 : vector<16x1xi1> to vector<16x1xi32>
    %26 = arith.sitofp %25 : vector<16x1xi32> to vector<16x1xf32>
    %c1_i32_5 = arith.constant 1 : i32
    %27 = tpu.dynamic_rotate %1 by %c1_i32_5 dim 0 : vector<16x128xf32>, i32 -> vector<16x128xf32>
    %28 = vector.broadcast %22 : vector<16x1xf32> to vector<16x128xf32>
    %29 = arith.mulf %27, %28 : vector<16x128xf32>
    %30 = arith.truncf %29 : vector<16x128xf32> to vector<16x128xbf16>
    %c15_i32_6 = arith.constant 15 : i32
    %31 = tpu.dynamic_rotate %1 by %c15_i32_6 dim 0 : vector<16x128xf32>, i32 -> vector<16x128xf32>
    %32 = vector.broadcast %26 : vector<16x1xf32> to vector<16x128xf32>
    %33 = arith.mulf %31, %32 : vector<16x128xf32>
    %34 = arith.truncf %33 : vector<16x128xf32> to vector<16x128xbf16>
    %35 = tpu.concatenate %30, %0, %34 in 1 : vector<16x128xbf16>, vector<16x128xbf16>, vector<16x128xbf16> -> vector<16x384xbf16>
    %c0_7 = arith.constant 0 : index
    %c0_8 = arith.constant 0 : index
    %36 = vector.load %arg2[%c0_7, %c0_8] : memref<384x128xbf16, #tpu.memory_space<vmem>>, vector<384x128xbf16>
    %cst = arith.constant dense<0.000000e+00> : vector<16x128xf32>
    %37 = tpu.matmul %35, %36, %cst {dimension_numbers = #tpu.dot_dimension_numbers<[1], [0], [0], [1], [0, 0, 1, 1], [], []>} : vector<16x384xbf16>, vector<384x128xbf16>, vector<16x128xf32> -> vector<16x128xf32>
    %38 = arith.truncf %37 : vector<16x128xf32> to vector<16x128xbf16>
    %c0_9 = arith.constant 0 : index
    %c0_10 = arith.constant 0 : index
    %39 = vector.load %arg4[%c0_9, %c0_10] : memref<16x128xbf16, #tpu.memory_space<vmem>>, vector<16x128xbf16>
    tpu.vector_store %arg4[%c0_9, %c0_10], %38 {strides = array<i32>} : memref<16x128xbf16, #tpu.memory_space<vmem>>, vector<16x128xbf16>,
    %cst_11 = arith.constant dense<0.000000e+00> : vector<128xf32>
    %40 = vector.multi_reduction <add>, %37, %cst_11 [0] : vector<16x128xf32> to vector<128xf32>
    %41 = vector.shape_cast %40 : vector<128xf32> to vector<1x128xf32>
    %42 = vector.shape_cast %41 : vector<1x128xf32> to vector<1x1x128xf32>
    %c0_12 = arith.constant 0 : index
    %c0_13 = arith.constant 0 : index
    %c0_14 = arith.constant 0 : index
    %43 = vector.load %arg6[%c0_12, %c0_13, %c0_14] : memref<1x1x128xf32, #tpu.memory_space<vmem>>, vector<1x1x128xf32>
    tpu.vector_store %arg6[%c0_12, %c0_13, %c0_14], %42 {strides = array<i32>} : memref<1x1x128xf32, #tpu.memory_space<vmem>>, vector<1x1x128xf32>,
    %44 = arith.mulf %37, %37 : vector<16x128xf32>
    %cst_15 = arith.constant dense<0.000000e+00> : vector<128xf32>
    %45 = vector.multi_reduction <add>, %44, %cst_15 [0] : vector<16x128xf32> to vector<128xf32>
    %46 = vector.shape_cast %45 : vector<128xf32> to vector<1x128xf32>
    %47 = vector.shape_cast %46 : vector<1x128xf32> to vector<1x1x128xf32>
    %c0_16 = arith.constant 0 : index
    %c0_17 = arith.constant 0 : index
    %c0_18 = arith.constant 0 : index
    %48 = vector.load %arg7[%c0_16, %c0_17, %c0_18] : memref<1x1x128xf32, #tpu.memory_space<vmem>>, vector<1x1x128xf32>
    tpu.vector_store %arg7[%c0_16, %c0_17, %c0_18], %47 {strides = array<i32>} : memref<1x1x128xf32, #tpu.memory_space<vmem>>, vector<1x1x128xf32>,
    %c0_19 = arith.constant 0 : index
    %c0_20 = arith.constant 0 : index
    %49 = vector.load %arg3[%c0_19, %c0_20] : memref<128x128xbf16, #tpu.memory_space<vmem>>, vector<128x128xbf16>
    %cst_21 = arith.constant dense<0.000000e+00> : vector<16x128xf32>
    %50 = tpu.matmul %0, %49, %cst_21 {dimension_numbers = #tpu.dot_dimension_numbers<[1], [0], [0], [1], [0, 0, 1, 1], [], []>} : vector<16x128xbf16>, vector<128x128xbf16>, vector<16x128xf32> -> vector<16x128xf32>
    %51 = arith.truncf %50 : vector<16x128xf32> to vector<16x128xbf16>
    %c0_22 = arith.constant 0 : index
    %c0_23 = arith.constant 0 : index
    %52 = vector.load %arg5[%c0_22, %c0_23] : memref<16x128xbf16, #tpu.memory_space<vmem>>, vector<16x128xbf16>
    tpu.vector_store %arg5[%c0_22, %c0_23], %51 {strides = array<i32>} : memref<16x128xbf16, #tpu.memory_space<vmem>>, vector<16x128xbf16>,
    %cst_24 = arith.constant dense<0.000000e+00> : vector<128xf32>
    %53 = vector.multi_reduction <add>, %50, %cst_24 [0] : vector<16x128xf32> to vector<128xf32>
    %54 = vector.shape_cast %53 : vector<128xf32> to vector<1x128xf32>
    %55 = vector.shape_cast %54 : vector<1x128xf32> to vector<1x1x128xf32>
    %c0_25 = arith.constant 0 : index
    %c0_26 = arith.constant 0 : index
    %c0_27 = arith.constant 0 : index
    %56 = vector.load %arg8[%c0_25, %c0_26, %c0_27] : memref<1x1x128xf32, #tpu.memory_space<vmem>>, vector<1x1x128xf32>
    tpu.vector_store %arg8[%c0_25, %c0_26, %c0_27], %55 {strides = array<i32>} : memref<1x1x128xf32, #tpu.memory_space<vmem>>, vector<1x1x128xf32>,
    %57 = arith.mulf %50, %50 : vector<16x128xf32>
    %cst_28 = arith.constant dense<0.000000e+00> : vector<128xf32>
    %58 = vector.multi_reduction <add>, %57, %cst_28 [0] : vector<16x128xf32> to vector<128xf32>
    %59 = vector.shape_cast %58 : vector<128xf32> to vector<1x128xf32>
    %60 = vector.shape_cast %59 : vector<1x128xf32> to vector<1x1x128xf32>
    %c0_29 = arith.constant 0 : index
    %c0_30 = arith.constant 0 : index
    %c0_31 = arith.constant 0 : index
    %61 = vector.load %arg9[%c0_29, %c0_30, %c0_31] : memref<1x1x128xf32, #tpu.memory_space<vmem>>, vector<1x1x128xf32>
    tpu.vector_store %arg9[%c0_29, %c0_30, %c0_31], %60 {strides = array<i32>} : memref<1x1x128xf32, #tpu.memory_space<vmem>>, vector<1x1x128xf32>,
    return
  }
  func.func @transform_0(%arg0: i32) -> (i32, i32) {
    %c0_i32 = arith.constant 0 : i32
    %c0_i32_0 = arith.constant 0 : i32
    return %arg0, %c0_i32 : i32, i32
  }
  func.func @transform_1(%arg0: i32) -> (i32, i32) {
    %c0_i32 = arith.constant 0 : i32
    %c0_i32_0 = arith.constant 0 : i32
    %c0_i32_1 = arith.constant 0 : i32
    return %c0_i32, %c0_i32_0 : i32, i32
  }
  func.func @transform_2(%arg0: i32) -> (i32, i32) {
    %c0_i32 = arith.constant 0 : i32
    %c0_i32_0 = arith.constant 0 : i32
    %c0_i32_1 = arith.constant 0 : i32
    return %c0_i32, %c0_i32_0 : i32, i32
  }
  func.func @transform_3(%arg0: i32) -> (i32, i32) {
    %c0_i32 = arith.constant 0 : i32
    %c0_i32_0 = arith.constant 0 : i32
    return %arg0, %c0_i32 : i32, i32
  }
  func.func @transform_4(%arg0: i32) -> (i32, i32) {
    %c0_i32 = arith.constant 0 : i32
    %c0_i32_0 = arith.constant 0 : i32
    return %arg0, %c0_i32 : i32, i32
  }
  func.func @transform_5(%arg0: i32) -> (i32, i32, i32) {
    %c0_i32 = arith.constant 0 : i32
    %c0_i32_0 = arith.constant 0 : i32
    %c0_i32_1 = arith.constant 0 : i32
    return %arg0, %c0_i32, %c0_i32_0 : i32, i32, i32
  }
  func.func @transform_6(%arg0: i32) -> (i32, i32, i32) {
    %c0_i32 = arith.constant 0 : i32
    %c0_i32_0 = arith.constant 0 : i32
    %c0_i32_1 = arith.constant 0 : i32
    return %arg0, %c0_i32, %c0_i32_0 : i32, i32, i32
  }
  func.func @transform_7(%arg0: i32) -> (i32, i32, i32) {
    %c0_i32 = arith.constant 0 : i32
    %c0_i32_0 = arith.constant 0 : i32
    %c0_i32_1 = arith.constant 0 : i32
    return %arg0, %c0_i32, %c0_i32_0 : i32, i32, i32
  }
  func.func @transform_8(%arg0: i32) -> (i32, i32, i32) {
    %c0_i32 = arith.constant 0 : i32
    %c0_i32_0 = arith.constant 0 : i32
    %c0_i32_1 = arith.constant 0 : i32
    return %arg0, %c0_i32, %c0_i32_0 : i32, i32, i32
  }
}

</mosaic_0001>

<llo_original>
// kernel: tpu_custom_call.1
$region0: #{tpu_custom_call.1}
  #allocation0 [shape = 'u32[]', space=smem, size = 0x4, offset = 0x4, fixed_abs, tag = 'smem constant byte address 0x4 - core index']
  #allocation1 [shape = 'u32[144,128]{1,0:T(1,128)}', space=vmem, size = 0x12000, scoped, tag = 'internal scratch']
  %s0 = inlined_call_operand.hbm [shape: bf16[32,128], index: 0, kind: input, shape index: {}]
  %s1 = inlined_call_operand.hbm [shape: bf16[384,128], index: 1, kind: input, shape index: {}]
  %s2 = inlined_call_operand.hbm [shape: bf16[128,128], index: 2, kind: input, shape index: {}]
  %s3 = inlined_call_operand.hbm [shape: bf16[32,128], index: 3, kind: output, shape index: {0}]
  %s4 = inlined_call_operand.hbm [shape: bf16[32,128], index: 4, kind: output, shape index: {1}]
  %s5 = inlined_call_operand.hbm [shape: f32[2,1,128], index: 5, kind: output, shape index: {2}]
  %s6 = inlined_call_operand.hbm [shape: f32[2,1,128], index: 6, kind: output, shape index: {3}]
  %s7 = inlined_call_operand.hbm [shape: f32[2,1,128], index: 7, kind: output, shape index: {4}]
  %s8 = inlined_call_operand.hbm [shape: f32[2,1,128], index: 8, kind: output, shape index: {5}]
  %9 = xla_tuple %s3, %s4, %s5, %s6, %s7, %s8
  %s10 = sld [smem:[#allocation0]]
  $region97: #{tpu_custom_call.1} parent=0
    _
  %s12 = ssub.s32 1, %s10
  %s13 = scalar_select 0, %s12, %s10
  $region1: #{tpu_custom_call.1} parent=0
    #allocation2 [shape = 'u8[8192]{0}', space=vmem, size = 0x2000, scoped, tag = 'input window, operand 0']
    #allocation3 [shape = 's32[2]{0}', space=sflag, size = 0x8, scoped, tag = 'scoped memory for tpu_custom_call.1']
    #allocation4 [shape = 's32[2]{0}', space=sflag, size = 0x8, scoped, tag = 'scoped memory for tpu_custom_call.1']
    #allocation5 [shape = 'u8[98304]{0}', space=vmem, size = 0x18000, scoped, tag = 'input window, operand 1, single buffered']
    #allocation6 [shape = 's32[1]{0}', space=sflag, size = 0x4, scoped, tag = 'scoped memory for tpu_custom_call.1']
    #allocation7 [shape = 'u8[32768]{0}', space=vmem, size = 0x8000, scoped, tag = 'input window, operand 2, single buffered']
    #allocation8 [shape = 'u8[8192]{0}', space=vmem, size = 0x2000, scoped, tag = 'output window, operand 0']
    #allocation9 [shape = 'u8[8192]{0}', space=vmem, size = 0x2000, scoped, tag = 'output window, operand 1']
    #allocation10 [shape = 's32[2]{0}', space=sflag, size = 0x8, scoped, tag = 'scoped memory for tpu_custom_call.1']
    #allocation11 [shape = 'u8[1024]{0}', space=vmem, size = 0x400, scoped, tag = 'output window, operand 2']
    #allocation12 [shape = 'u8[1024]{0}', space=vmem, size = 0x400, scoped, tag = 'output window, operand 3']
    #allocation13 [shape = 's32[2]{0}', space=sflag, size = 0x8, scoped, tag = 'scoped memory for tpu_custom_call.1']
    #allocation14 [shape = 'u8[1024]{0}', space=vmem, size = 0x400, scoped, tag = 'output window, operand 4']
    #allocation15 [shape = 'u8[1024]{0}', space=vmem, size = 0x400, scoped, tag = 'output window, operand 5']
    #allocation16 [shape = 's32[2]{0}', space=sflag, size = 0x8, scoped, tag = 'scoped memory for tpu_custom_call.1']
    %14 = vsyncpa [#allocation3], 0
    %s15 = scalar_lea.sflag [#allocation3], 1
    %16 = vsyncpa %s15, 0
    %17 = vsyncpa [#allocation6], 0
    %18 = vsyncpa [#allocation4], 0
    %s19 = scalar_lea.sflag [#allocation4], 1
    %20 = vsyncpa %s19, 0
    %21 = vsyncpa [#allocation10], 0
    %s22 = scalar_lea.sflag [#allocation10], 1
    %23 = vsyncpa %s22, 0
    %24 = vsyncpa [#allocation13], 0
    %s25 = scalar_lea.sflag [#allocation13], 1
    %26 = vsyncpa %s25, 0
    %27 = vsyncpa [#allocation16], 0
    %s28 = scalar_lea.sflag [#allocation16], 1
    %29 = vsyncpa %s28, 0
    loop: start=0, step=1, limit=4
    $region2: #{tpu_custom_call.1} parent=1 // loop_pre_header
      _
    $region3: #{tpu_custom_call.1} parent=1 // loop_header
      %s31 = sphi 0, %s35
      %p32 = scmp.ge.s32.totalorder %s31, 4
      %s41 = sphi 0, %s43
      %s44 = sphi 0, %s41
      %s45 = sphi 0, %s44
      %s61 = sphi 0, %s45
      %s65 = sphi 0, %s65
      %s67 = sphi 0, %s65
      %s68 = sphi 0, %s67
      %s82 = sphi 0, %s68
      %s86 = sphi 0, %s86
      %s88 = sphi 0, %s86
      %s89 = sphi 0, %s88
      %s103 = sphi 0, %s89
      %s109 = sphi 0, %s111
      %s112 = sphi 0, %s109
      %s113 = sphi 0, %s112
      %s129 = sphi 0, %s113
      %s135 = sphi 0, %s137
      %s138 = sphi 0, %s135
      %s139 = sphi 0, %s138
      %s155 = sphi 0, %s139
      %s161 = sphi 0, %s163
      %s164 = sphi 0, %s161
      %s165 = sphi 0, %s164
      %s181 = sphi 0, %s165
      %s187 = sphi 0, %s189
      %s190 = sphi 0, %s187
      %s191 = sphi 0, %s190
      %s207 = sphi 0, %s191
      %s213 = sphi 0, %s215
      %s216 = sphi 0, %s213
      %s217 = sphi 0, %s216
      %s233 = sphi 0, %s217
      %s239 = sphi 0, %s241
      %s242 = sphi 0, %s239
      %s243 = sphi 0, %s242
      %s259 = sphi 0, %s243
    $region4: #{tpu_custom_call.1} parent=1 // loop_header_branch
      %34 = sbr.rel (%p32) target = $region8
    $region5: #{tpu_custom_call.1} parent=1 // loop_body
      %s36 = ssub.s32 %s31, 1
      %s37 = ssub.s32 %s31, 2
      %s38 = sadd.s32 %s31, 1
      %s39 = ssub.s32 %s31, %s38
      %p40 = scmp.eq.s32.totalorder %s39, 0
      %s42 = sadd.s32 %s41, 1
      %s43 = scalar_select %p40, %s41, %s42
      %p46 = pneg %p40
      %p47 = scmp.eq.s32.totalorder %s31, 1
      %p48 = por %p46, %p47
      %p49 = scmp.ne.s32.totalorder %s41, %s44
      %p50 = scmp.eq.s32.totalorder %s31, 0
      %p51 = por %p49, %p50
      %p52 = scmp.ne.s32.totalorder %s41, %s44
      %p53 = scmp.eq.s32.totalorder %s36, 1
      %p54 = por %p52, %p53
      %p55 = scmp.ne.s32.totalorder %s44, %s45
      %p56 = scmp.eq.s32.totalorder %s36, 0
      %p57 = por %p55, %p56
      %p58 = scmp.ne.s32.totalorder %s44, %s45
      %p59 = scmp.eq.s32.totalorder %s37, 1
      %p60 = por %p58, %p59
      %p62 = scmp.ne.s32.totalorder %s45, %s61
      %p63 = scmp.eq.s32.totalorder %s37, 0
      %p64 = por %p62, %p63
      %s66 = sadd.s32 %s65, 1
      %p69 = scmp.eq.s32.totalorder %s31, 1
      %p70 = scmp.ne.s32.totalorder %s65, %s67
      %p71 = scmp.eq.s32.totalorder %s31, 0
      %p72 = por %p70, %p71
      %p73 = scmp.ne.s32.totalorder %s65, %s67
      %p74 = scmp.eq.s32.totalorder %s36, 1
      %p75 = por %p73, %p74
      %p76 = scmp.ne.s32.totalorder %s67, %s68
      %p77 = scmp.eq.s32.totalorder %s36, 0
      %p78 = por %p76, %p77
      %p79 = scmp.ne.s32.totalorder %s67, %s68
      %p80 = scmp.eq.s32.totalorder %s37, 1
      %p81 = por %p79, %p80
      %p83 = scmp.ne.s32.totalorder %s68, %s82
      %p84 = scmp.eq.s32.totalorder %s37, 0
      %p85 = por %p83, %p84
      %s87 = sadd.s32 %s86, 1
      %p90 = scmp.eq.s32.totalorder %s31, 1
      %p91 = scmp.ne.s32.totalorder %s86, %s88
      %p92 = scmp.eq.s32.totalorder %s31, 0
      %p93 = por %p91, %p92
      %p94 = scmp.ne.s32.totalorder %s86, %s88
      %p95 = scmp.eq.s32.totalorder %s36, 1
      %p96 = por %p94, %p95
      %p97 = scmp.ne.s32.totalorder %s88, %s89
      %p98 = scmp.eq.s32.totalorder %s36, 0
      %p99 = por %p97, %p98
      %p100 = scmp.ne.s32.totalorder %s88, %s89
      %p101 = scmp.eq.s32.totalorder %s37, 1
      %p102 = por %p100, %p101
      %p104 = scmp.ne.s32.totalorder %s89, %s103
      %p105 = scmp.eq.s32.totalorder %s37, 0
      %p106 = por %p104, %p105
      %s107 = ssub.s32 %s31, %s38
      %p108 = scmp.eq.s32.totalorder %s107, 0
      %s110 = sadd.s32 %s109, 1
      %s111 = scalar_select %p108, %s109, %s110
      %p114 = pneg %p108
      %p115 = scmp.eq.s32.totalorder %s31, 1
      %p116 = por %p114, %p115
      %p117 = scmp.ne.s32.totalorder %s109, %s112
      %p118 = scmp.eq.s32.totalorder %s31, 0
      %p119 = por %p117, %p118
      %p120 = scmp.ne.s32.totalorder %s109, %s112
      %p121 = scmp.eq.s32.totalorder %s36, 1
      %p122 = por %p120, %p121
      %p123 = scmp.ne.s32.totalorder %s112, %s113
      %p124 = scmp.eq.s32.totalorder %s36, 0
      %p125 = por %p123, %p124
      %p126 = scmp.ne.s32.totalorder %s112, %s113
      %p127 = scmp.eq.s32.totalorder %s37, 1
      %p128 = por %p126, %p127
      %p130 = scmp.ne.s32.totalorder %s113, %s129
      %p131 = scmp.eq.s32.totalorder %s37, 0
      %p132 = por %p130, %p131
      %s133 = ssub.s32 %s31, %s38
      %p134 = scmp.eq.s32.totalorder %s133, 0
      %s136 = sadd.s32 %s135, 1
      %s137 = scalar_select %p134, %s135, %s136
      %p140 = pneg %p134
      %p141 = scmp.eq.s32.totalorder %s31, 1
      %p142 = por %p140, %p141
      %p143 = scmp.ne.s32.totalorder %s135, %s138
      %p144 = scmp.eq.s32.totalorder %s31, 0
      %p145 = por %p143, %p144
      %p146 = scmp.ne.s32.totalorder %s135, %s138
      %p147 = scmp.eq.s32.totalorder %s36, 1
      %p148 = por %p146, %p147
      %p149 = scmp.ne.s32.totalorder %s138, %s139
      %p150 = scmp.eq.s32.totalorder %s36, 0
      %p151 = por %p149, %p150
      %p152 = scmp.ne.s32.totalorder %s138, %s139
      %p153 = scmp.eq.s32.totalorder %s37, 1
      %p154 = por %p152, %p153
      %p156 = scmp.ne.s32.totalorder %s139, %s155
      %p157 = scmp.eq.s32.totalorder %s37, 0
      %p158 = por %p156, %p157
      %s159 = ssub.s32 %s31, %s38
      %p160 = scmp.eq.s32.totalorder %s159, 0
      %s162 = sadd.s32 %s161, 1
      %s163 = scalar_select %p160, %s161, %s162
      %p166 = pneg %p160
      %p167 = scmp.eq.s32.totalorder %s31, 1
      %p168 = por %p166, %p167
      %p169 = scmp.ne.s32.totalorder %s161, %s164
      %p170 = scmp.eq.s32.totalorder %s31, 0
      %p171 = por %p169, %p170
      %p172 = scmp.ne.s32.totalorder %s161, %s164
      %p173 = scmp.eq.s32.totalorder %s36, 1
      %p174 = por %p172, %p173
      %p175 = scmp.ne.s32.totalorder %s164, %s165
      %p176 = scmp.eq.s32.totalorder %s36, 0
      %p177 = por %p175, %p176
      %p178 = scmp.ne.s32.totalorder %s164, %s165
      %p179 = scmp.eq.s32.totalorder %s37, 1
      %p180 = por %p178, %p179
      %p182 = scmp.ne.s32.totalorder %s165, %s181
      %p183 = scmp.eq.s32.totalorder %s37, 0
      %p184 = por %p182, %p183
      %s185 = ssub.s32 %s31, %s38
      %p186 = scmp.eq.s32.totalorder %s185, 0
      %s188 = sadd.s32 %s187, 1
      %s189 = scalar_select %p186, %s187, %s188
      %p192 = pneg %p186
      %p193 = scmp.eq.s32.totalorder %s31, 1
      %p194 = por %p192, %p193
      %p195 = scmp.ne.s32.totalorder %s187, %s190
      %p196 = scmp.eq.s32.totalorder %s31, 0
      %p197 = por %p195, %p196
      %p198 = scmp.ne.s32.totalorder %s187, %s190
      %p199 = scmp.eq.s32.totalorder %s36, 1
      %p200 = por %p198, %p199
      %p201 = scmp.ne.s32.totalorder %s190, %s191
      %p202 = scmp.eq.s32.totalorder %s36, 0
      %p203 = por %p201, %p202
      %p204 = scmp.ne.s32.totalorder %s190, %s191
      %p205 = scmp.eq.s32.totalorder %s37, 1
      %p206 = por %p204, %p205
      %p208 = scmp.ne.s32.totalorder %s191, %s207
      %p209 = scmp.eq.s32.totalorder %s37, 0
      %p210 = por %p208, %p209
      %s211 = ssub.s32 %s31, %s38
      %p212 = scmp.eq.s32.totalorder %s211, 0
      %s214 = sadd.s32 %s213, 1
      %s215 = scalar_select %p212, %s213, %s214
      %p218 = pneg %p212
      %p219 = scmp.eq.s32.totalorder %s31, 1
      %p220 = por %p218, %p219
      %p221 = scmp.ne.s32.totalorder %s213, %s216
      %p222 = scmp.eq.s32.totalorder %s31, 0
      %p223 = por %p221, %p222
      %p224 = scmp.ne.s32.totalorder %s213, %s216
      %p225 = scmp.eq.s32.totalorder %s36, 1
      %p226 = por %p224, %p225
      %p227 = scmp.ne.s32.totalorder %s216, %s217
      %p228 = scmp.eq.s32.totalorder %s36, 0
      %p229 = por %p227, %p228
      %p230 = scmp.ne.s32.totalorder %s216, %s217
      %p231 = scmp.eq.s32.totalorder %s37, 1
      %p232 = por %p230, %p231
      %p234 = scmp.ne.s32.totalorder %s217, %s233
      %p235 = scmp.eq.s32.totalorder %s37, 0
      %p236 = por %p234, %p235
      %s237 = ssub.s32 %s31, %s38
      %p238 = scmp.eq.s32.totalorder %s237, 0
      %s240 = sadd.s32 %s239, 1
      %s241 = scalar_select %p238, %s239, %s240
      %p244 = pneg %p238
      %p245 = scmp.eq.s32.totalorder %s31, 1
      %p246 = por %p244, %p245
      %p247 = scmp.ne.s32.totalorder %s239, %s242
      %p248 = scmp.eq.s32.totalorder %s31, 0
      %p249 = por %p247, %p248
      %p250 = scmp.ne.s32.totalorder %s239, %s242
      %p251 = scmp.eq.s32.totalorder %s36, 1
      %p252 = por %p250, %p251
      %p253 = scmp.ne.s32.totalorder %s242, %s243
      %p254 = scmp.eq.s32.totalorder %s36, 0
      %p255 = por %p253, %p254
      %p256 = scmp.ne.s32.totalorder %s242, %s243
      %p257 = scmp.eq.s32.totalorder %s37, 1
      %p258 = por %p256, %p257
      %p260 = scmp.ne.s32.totalorder %s243, %s259
      %p261 = scmp.eq.s32.totalorder %s37, 0
      %p262 = por %p260, %p261
      %p263 = scmp.le.s32.totalorder 1, %s31
      %p264 = scmp.lt.s32.totalorder %s31, 3
      %p265 = pnand %p263, %p264
      %p266 = pneg %p265
      // Predicated region
      $region9: #{tpu_custom_call.1} parent=5 // pred_check
        _
      $region10: #{tpu_custom_call.1} parent=5 // pred_check_branch
        %268 = sbr.rel (%p265) target = $region12
      $region11: #{tpu_custom_call.1} parent=5 // pred_region
        %s269 = ssub.s32 %s31, 1
        // Predicated region
        $region13: #{tpu_custom_call.1} parent=11 // pred_check
          %p270 = pneg %p78
        $region14: #{tpu_custom_call.1} parent=11 // pred_check_branch
          %272 = sbr.rel (%p270) target = $region16
        $region15: #{tpu_custom_call.1} parent=11 // pred_region
          %s274 = ssub.s32 3072, 3072
          %275 = vsyncadd [#allocation6], %s274
          %s276 = sshll.u32 [#allocation5], 4
          %s277 = int_to_ptr.vmem [resolvable:$true] %s276
          %282 = dma.hbm_to_vmem [thread:$0]  %s1, 3072, %s277, [#allocation6], 64, 64, 4
        $region16: #{tpu_custom_call.1} parent=11 // pred_fallthru
          _
        // Predicated region
        $region17: #{tpu_custom_call.1} parent=11 // pred_check
          %p283 = pneg %p99
        $region18: #{tpu_custom_call.1} parent=11 // pred_check_branch
          %285 = sbr.rel (%p283) target = $region20
        $region19: #{tpu_custom_call.1} parent=11 // pred_region
          %s287 = ssub.s32 1024, 1024
          %288 = vsyncadd [#allocation6], %s287
          %s289 = sshll.u32 [#allocation7], 4
          %s290 = int_to_ptr.vmem [resolvable:$true] %s289
          %295 = dma.hbm_to_vmem [thread:$0]  %s2, 1024, %s290, [#allocation6], 64, 64, 4
        $region20: #{tpu_custom_call.1} parent=11 // pred_fallthru
          _
      $region12: #{tpu_custom_call.1} parent=5 // pred_fallthru
        _
      %p296 = scmp.lt.s32.totalorder %s31, 2
      // Predicated region
      $region21: #{tpu_custom_call.1} parent=5 // pred_check
        %p297 = pneg %p296
      $region22: #{tpu_custom_call.1} parent=5 // pred_check_branch
        %299 = sbr.rel (%p297) target = $region24
      $region23: #{tpu_custom_call.1} parent=5 // pred_region
        // Predicated region
        $region25: #{tpu_custom_call.1} parent=23 // pred_check
          %p300 = pneg %p51
        $region26: #{tpu_custom_call.1} parent=23 // pred_check_branch
          %302 = sbr.rel (%p300) target = $region28
        $region27: #{tpu_custom_call.1} parent=23 // pred_region
          %s303 = sand.u32 %s41, 1
          %s304 = scalar_lea.sflag [#allocation3], %s303
          %s305 = sand.u32 %s41, 1
          %s306 = smul.addr %s305, 8
          %s307 = scalar_lea.vmem [#allocation2], %s306
          %s308 = smul.u32 2, %s31
          %s310 = ssub.s32 128, 128
          %311 = vsyncadd %s304, %s310
          %s312 = smul.addr %s308, 64
          %s313 = scalar_lea.hbm %s0, %s312
          %s314 = sshll.u32 %s307, 4
          %s315 = int_to_ptr.vmem [resolvable:$true] %s314
          %320 = dma.hbm_to_vmem [thread:$0]  %s313, 128, %s315, %s304, 64, 64, 4
        $region28: #{tpu_custom_call.1} parent=23 // pred_fallthru
          _
      $region24: #{tpu_custom_call.1} parent=5 // pred_fallthru
        _
      %p321 = scmp.le.s32.totalorder 1, %s31
      %p322 = scmp.lt.s32.totalorder %s31, 3
      %p323 = pnand %p321, %p322
      %p324 = pneg %p323
      // Predicated region
      $region29: #{tpu_custom_call.1} parent=5 // pred_check
        _
      $region30: #{tpu_custom_call.1} parent=5 // pred_check_branch
        %326 = sbr.rel (%p323) target = $region32
      $region31: #{tpu_custom_call.1} parent=5 // pred_region
        %s327 = ssub.s32 %s31, 1
        %s328 = sand.u32 %s44, 1
        %s329 = scalar_lea.sflag [#allocation3], %s328
        %s330 = sand.u32 %s44, 1
        %s331 = smul.addr %s330, 8
        %s332 = scalar_lea.vmem [#allocation2], %s331
        // Predicated region
        $region33: #{tpu_custom_call.1} parent=31 // pred_check
          %p333 = pneg %p57
        $region34: #{tpu_custom_call.1} parent=31 // pred_check_branch
          %335 = sbr.rel (%p333) target = $region36
        $region35: #{tpu_custom_call.1} parent=31 // pred_region
          %336 = dma.done %s329, 128
        $region36: #{tpu_custom_call.1} parent=31 // pred_fallthru
          _
        // Predicated region
        $region37: #{tpu_custom_call.1} parent=31 // pred_check
          %p337 = pneg %p78
        $region38: #{tpu_custom_call.1} parent=31 // pred_check_branch
          %339 = sbr.rel (%p337) target = $region40
        $region39: #{tpu_custom_call.1} parent=31 // pred_region
          %340 = dma.done [#allocation6], 3072
        $region40: #{tpu_custom_call.1} parent=31 // pred_fallthru
          _
        // Predicated region
        $region41: #{tpu_custom_call.1} parent=31 // pred_check
          %p341 = pneg %p99
        $region42: #{tpu_custom_call.1} parent=31 // pred_check_branch
          %343 = sbr.rel (%p341) target = $region44
        $region43: #{tpu_custom_call.1} parent=31 // pred_region
          %344 = dma.done [#allocation6], 1024
        $region44: #{tpu_custom_call.1} parent=31 // pred_fallthru
          _
        %s345 = sand.u32 %s44, 1
        %s346 = scalar_lea.sflag [#allocation3], %s345
        %s347 = sand.u32 %s44, 1
        %s348 = smul.addr %s347, 8
        %s349 = scalar_lea.vmem [#allocation2], %s348
        %p350 = pneg %p57
        %p351 = pneg %p54
        %p352 = pneg %p78
        %p353 = pneg %p75
        %p354 = pneg %p99
        %p355 = pneg %p96
        %p356 = pneg %p125
        %p357 = pneg %p122
        %s358 = sand.u32 %s112, 1
        %s359 = scalar_lea.sflag [#allocation4], %s358
        %s360 = sand.u32 %s112, 1
        %s361 = smul.addr %s360, 8
        %s362 = scalar_lea.vmem [#allocation8], %s361
        %p363 = pneg %p151
        %p364 = pneg %p148
        %s365 = sand.u32 %s36, 1
        %s366 = scalar_lea.sflag [#allocation10], %s365
        %s367 = sand.u32 %s138, 1
        %s368 = smul.addr %s367, 8
        %s369 = scalar_lea.vmem [#allocation9], %s368
        %p370 = pneg %p177
        %p371 = pneg %p174
        %s372 = sand.u32 %s36, 1
        %s373 = scalar_lea.sflag [#allocation10], %s372
        %s374 = sand.u32 %s164, 1
        %s375 = scalar_lea.vmem [#allocation11], %s374
        %p376 = pneg %p203
        %p377 = pneg %p200
        %s378 = sand.u32 %s36, 1
        %s379 = scalar_lea.sflag [#allocation13], %s378
        %s380 = sand.u32 %s190, 1
        %s381 = scalar_lea.vmem [#allocation12], %s380
        %p382 = pneg %p229
        %p383 = pneg %p226
        %s384 = sand.u32 %s36, 1
        %s385 = scalar_lea.sflag [#allocation13], %s384
        %s386 = sand.u32 %s216, 1
        %s387 = scalar_lea.vmem [#allocation14], %s386
        %p388 = pneg %p255
        %p389 = pneg %p252
        %s390 = sand.u32 %s242, 1
        %s391 = scalar_lea.sflag [#allocation16], %s390
        %s392 = sand.u32 %s242, 1
        %s393 = scalar_lea.vmem [#allocation15], %s392
        %s394 = smul.u32 2, %s36
        %s395 = smul.u32 2, %s36
        %s396 = smul.u32 2, %s36
        %v398 = vld [vmem:[%s332] sm:$0xf]
        %v399 = vld [vmem:[%s332 + $0x4] sm:$0xf]
        %v400 = vunpack.c.l.bf16 %v398
        %v401 = vunpack.c.l.bf16 %v399
        %v402 = vlaneseq
        %v403 = vshrl.u32 %v402, 7
        %v404 = vadd.s32 %v403, 8
        %vm405 = vcmp.lt.s32.totalorder %v403, 0
        %v406 = vsub.s32 0, %v403
        %v407 = vsel %vm405, %v406, %v403
        %v408 = vshrl.u32 %v407, 4
        %v409 = vand.u32 %v407, 15
        %v410 = vsub.s32 0, %v409
        %v411 = vsel %vm405, %v410, %v409
        %vm412 = vcmp.lt.s32.totalorder %v404, 0
        %v413 = vsub.s32 0, %v404
        %v414 = vsel %vm412, %v413, %v404
        %v415 = vshrl.u32 %v414, 4
        %v416 = vand.u32 %v414, 15
        %v417 = vsub.s32 0, %v416
        %v418 = vsel %vm412, %v417, %v416
        %vm419 = vcmp.ne.s32.totalorder %v411, 0
        %vm420 = vcmp.ne.s32.totalorder %v418, 0
        %vm421 = vcmp.lt.s32.totalorder %v411, 0
        %vm422 = vcmp.lt.s32.totalorder %v418, 0
        %vm423 = vmand %vm421, %vm419
        %vm424 = vmand %vm422, %vm420
        %v425 = vadd.s32 %v411, 16
        %v426 = vadd.s32 %v418, 16
        %v427 = vsel %vm423, %v425, %v411
        %v428 = vsel %vm424, %v426, %v418
        %vm429 = vcmp.ne.s32.totalorder %v427, 0
        %vm430 = vcmp.ne.s32.totalorder %v428, 0
        %v431 = vsel %vm429, 1, 0
        %v432 = vsel %vm430, 1, 0
        %v433 = vcvt.s32.f32 %v431
        %v434 = vcvt.s32.f32 %v432
        %vm435 = vcmp.ne.s32.totalorder %v427, 15
        %vm436 = vcmp.ne.s32.totalorder %v428, 15
        %v437 = vsel %vm435, 1, 0
        %v438 = vsel %vm436, 1, 0
        %v439 = vcvt.s32.f32 %v437
        %v440 = vcvt.s32.f32 %v438
        %v441 = vrot.slane %v400, 7
        %v442 = vrot.slane %v401, 7
        %vm443 = vcmp.lt.s32.totalorder %v403, 1
        %v444 = vsel %vm443, %v441, %v442
        %v445 = vsel %vm443, %v442, %v441
        %v446 = vmul.f32 %v445, %v433
        %v447 = vmul.f32 %v444, %v434
        %v448 = vpack.c.bf16 %v447, %v446
        %v449 = vrot.slane %v400, 1
        %v450 = vrot.slane %v401, 1
        %vm451 = vcmp.lt.s32.totalorder %v403, 7
        %v452 = vsel %vm451, %v449, %v450
        %v453 = vsel %vm451, %v450, %v449
        %v454 = vmul.f32 %v452, %v439
        %v455 = vmul.f32 %v453, %v440
        %v456 = vpack.c.bf16 %v455, %v454
        %v459 = vunpack.c.l.b16 %v398
        %v460 = vunpack.c.l.b16 %v399
        %v461 = vpack.c.b16 %v460, %v459
        %v463 = vld [vmem:[#allocation5] sm:$0xf]
        %v464 = vld [vmem:[#allocation5 + $0x4] sm:$0xf]
        %v465 = vld [vmem:[#allocation5 + $0x8] sm:$0xf]
        %v466 = vld [vmem:[#allocation5 + $0xc] sm:$0xf]
        %v467 = vld [vmem:[#allocation5 + $0x10] sm:$0xf]
        %v468 = vld [vmem:[#allocation5 + $0x14] sm:$0xf]
        %v469 = vld [vmem:[#allocation5 + $0x18] sm:$0xf]
        %v470 = vld [vmem:[#allocation5 + $0x1c] sm:$0xf]
        %v471 = vld [vmem:[#allocation5 + $0x20] sm:$0xf]
        %v472 = vld [vmem:[#allocation5 + $0x24] sm:$0xf]
        %v473 = vld [vmem:[#allocation5 + $0x28] sm:$0xf]
        %v474 = vld [vmem:[#allocation5 + $0x2c] sm:$0xf]
        %v475 = vld [vmem:[#allocation5 + $0x30] sm:$0xf]
        %v476 = vld [vmem:[#allocation5 + $0x34] sm:$0xf]
        %v477 = vld [vmem:[#allocation5 + $0x38] sm:$0xf]
        %v478 = vld [vmem:[#allocation5 + $0x3c] sm:$0xf]
        %v479 = vld [vmem:[#allocation5 + $0x40] sm:$0xf]
        %v480 = vld [vmem:[#allocation5 + $0x44] sm:$0xf]
        %v481 = vld [vmem:[#allocation5 + $0x48] sm:$0xf]
        %v482 = vld [vmem:[#allocation5 + $0x4c] sm:$0xf]
        %v483 = vld [vmem:[#allocation5 + $0x50] sm:$0xf]
        %v484 = vld [vmem:[#allocation5 + $0x54] sm:$0xf]
        %v485 = vld [vmem:[#allocation5 + $0x58] sm:$0xf]
        %v486 = vld [vmem:[#allocation5 + $0x5c] sm:$0xf]
        %v487 = vld [vmem:[#allocation5 + $0x60] sm:$0xf]
        %v488 = vld [vmem:[#allocation5 + $0x64] sm:$0xf]
        %v489 = vld [vmem:[#allocation5 + $0x68] sm:$0xf]
        %v490 = vld [vmem:[#allocation5 + $0x6c] sm:$0xf]
        %v491 = vld [vmem:[#allocation5 + $0x70] sm:$0xf]
        %v492 = vld [vmem:[#allocation5 + $0x74] sm:$0xf]
        %v493 = vld [vmem:[#allocation5 + $0x78] sm:$0xf]
        %v494 = vld [vmem:[#allocation5 + $0x7c] sm:$0xf]
        %v495 = vld [vmem:[#allocation5 + $0x80] sm:$0xf]
        %v496 = vld [vmem:[#allocation5 + $0x84] sm:$0xf]
        %v497 = vld [vmem:[#allocation5 + $0x88] sm:$0xf]
        %v498 = vld [vmem:[#allocation5 + $0x8c] sm:$0xf]
        %v499 = vld [vmem:[#allocation5 + $0x90] sm:$0xf]
        %v500 = vld [vmem:[#allocation5 + $0x94] sm:$0xf]
        %v501 = vld [vmem:[#allocation5 + $0x98] sm:$0xf]
        %v502 = vld [vmem:[#allocation5 + $0x9c] sm:$0xf]
        %v503 = vld [vmem:[#allocation5 + $0xa0] sm:$0xf]
        %v504 = vld [vmem:[#allocation5 + $0xa4] sm:$0xf]
        %v505 = vld [vmem:[#allocation5 + $0xa8] sm:$0xf]
        %v506 = vld [vmem:[#allocation5 + $0xac] sm:$0xf]
        %v507 = vld [vmem:[#allocation5 + $0xb0] sm:$0xf]
        %v508 = vld [vmem:[#allocation5 + $0xb4] sm:$0xf]
        %v509 = vld [vmem:[#allocation5 + $0xb8] sm:$0xf]
        %v510 = vld [vmem:[#allocation5 + $0xbc] sm:$0xf]
        %v559 = vunpack.c.l.b16 %v463
        %v560 = vunpack.c.l.b16 %v464
        %v561 = vunpack.c.l.b16 %v465
        %v562 = vunpack.c.l.b16 %v466
        %v563 = vunpack.c.l.b16 %v467
        %v564 = vunpack.c.l.b16 %v468
        %v565 = vunpack.c.l.b16 %v469
        %v566 = vunpack.c.l.b16 %v470
        %v567 = vunpack.c.l.b16 %v471
        %v568 = vunpack.c.l.b16 %v472
        %v569 = vunpack.c.l.b16 %v473
        %v570 = vunpack.c.l.b16 %v474
        %v571 = vunpack.c.l.b16 %v475
        %v572 = vunpack.c.l.b16 %v476
        %v573 = vunpack.c.l.b16 %v477
        %v574 = vunpack.c.l.b16 %v478
        %v575 = vunpack.c.l.b16 %v479
        %v576 = vunpack.c.l.b16 %v480
        %v577 = vunpack.c.l.b16 %v481
        %v578 = vunpack.c.l.b16 %v482
        %v579 = vunpack.c.l.b16 %v483
        %v580 = vunpack.c.l.b16 %v484
        %v581 = vunpack.c.l.b16 %v485
        %v582 = vunpack.c.l.b16 %v486
        %v583 = vunpack.c.l.b16 %v487
        %v584 = vunpack.c.l.b16 %v488
        %v585 = vunpack.c.l.b16 %v489
        %v586 = vunpack.c.l.b16 %v490
        %v587 = vunpack.c.l.b16 %v491
        %v588 = vunpack.c.l.b16 %v492
        %v589 = vunpack.c.l.b16 %v493
        %v590 = vunpack.c.l.b16 %v494
        %v591 = vunpack.c.l.b16 %v495
        %v592 = vunpack.c.l.b16 %v496
        %v593 = vunpack.c.l.b16 %v497
        %v594 = vunpack.c.l.b16 %v498
        %v595 = vunpack.c.l.b16 %v499
        %v596 = vunpack.c.l.b16 %v500
        %v597 = vunpack.c.l.b16 %v501
        %v598 = vunpack.c.l.b16 %v502
        %v599 = vunpack.c.l.b16 %v503
        %v600 = vunpack.c.l.b16 %v504
        %v601 = vunpack.c.l.b16 %v505
        %v602 = vunpack.c.l.b16 %v506
        %v603 = vunpack.c.l.b16 %v507
        %v604 = vunpack.c.l.b16 %v508
        %v605 = vunpack.c.l.b16 %v509
        %v606 = vunpack.c.l.b16 %v510
        %v607 = vpack.c.b16 %v560, %v559
        %v608 = vpack.c.b16 %v562, %v561
        %v609 = vpack.c.b16 %v564, %v563
        %v610 = vpack.c.b16 %v566, %v565
        %v611 = vpack.c.b16 %v568, %v567
        %v612 = vpack.c.b16 %v570, %v569
        %v613 = vpack.c.b16 %v572, %v571
        %v614 = vpack.c.b16 %v574, %v573
        %v615 = vpack.c.b16 %v576, %v575
        %v616 = vpack.c.b16 %v578, %v577
        %v617 = vpack.c.b16 %v580, %v579
        %v618 = vpack.c.b16 %v582, %v581
        %v619 = vpack.c.b16 %v584, %v583
        %v620 = vpack.c.b16 %v586, %v585
        %v621 = vpack.c.b16 %v588, %v587
        %v622 = vpack.c.b16 %v590, %v589
        %v623 = vpack.c.b16 %v592, %v591
        %v624 = vpack.c.b16 %v594, %v593
        %v625 = vpack.c.b16 %v596, %v595
        %v626 = vpack.c.b16 %v598, %v597
        %v627 = vpack.c.b16 %v600, %v599
        %v628 = vpack.c.b16 %v602, %v601
        %v629 = vpack.c.b16 %v604, %v603
        %v630 = vpack.c.b16 %v606, %v605
        %655 = vmatprep.subr.bf16.mxu0 0
        %656 = vmatpush1.bf16.msra.mxu0 %v607
        %657 = vmatprep.subr.bf16.mxu0 0
        %658 = vmatpush1.bf16.msra.mxu0 %v608
        %659 = vmatprep.subr.bf16.mxu0 0
        %660 = vmatpush1.bf16.msra.mxu0 %v609
        %661 = vmatprep.subr.bf16.mxu0 0
        %662 = vmatpush1.bf16.msra.mxu0 %v610
        %663 = vmatprep.subr.bf16.mxu0 0
        %664 = vmatpush1.bf16.msra.mxu0 %v611
        %665 = vmatprep.subr.bf16.mxu0 0
        %666 = vmatpush1.bf16.msra.mxu0 %v612
        %667 = vmatprep.subr.bf16.mxu0 0
        %668 = vmatpush1.bf16.msra.mxu0 %v613
        %669 = vmatprep.subr.bf16.mxu0 0
        %670 = vmatpush1.bf16.msra.mxu0 %v614
        %671 = vmatprep.subr.bf16.mxu0 0
        %672 = vmatpush1.bf16.msra.mxu0 %v615
        %673 = vmatprep.subr.bf16.mxu0 0
        %674 = vmatpush1.bf16.msra.mxu0 %v616
        %675 = vmatprep.subr.bf16.mxu0 0
        %676 = vmatpush1.bf16.msra.mxu0 %v617
        %677 = vmatprep.subr.bf16.mxu0 0
        %678 = vmatpush1.bf16.msra.mxu0 %v618
        %679 = vmatprep.subr.bf16.mxu0 0
        %680 = vmatpush1.bf16.msra.mxu0 %v619
        %681 = vmatprep.subr.bf16.mxu0 0
        %682 = vmatpush1.bf16.msra.mxu0 %v620
        %683 = vmatprep.subr.bf16.mxu0 0
        %684 = vmatpush1.bf16.msra.mxu0 %v621
        %685 = vmatprep.subr.bf16.mxu0 0
        %686 = vmatpush1.bf16.msra.mxu0 %v622
        %687 = vmatprep.mubr.bf16.mxu0 %v461
        %688 = vmatmul.mubr.bf16.gmra.mrb[0].mxu0 %v448
        %v689 = vpop.f32.mrb[0].mxu0
        %v690 = vadd.f32 0.0, %v689
        %v691 = vpop.f32.mrb[0].mxu0
        %v692 = vpop.f32.mrb[0].mxu0
        %v693 = vadd.f32 0.0, %v692
        %v694 = vpop.f32.mrb[0].mxu0
        %695 = vdwg.mxu0
        %696 = vmatprep.subr.bf16.mxu0 0
        %697 = vmatpush1.bf16.msra.mxu0 %v623
        %698 = vmatprep.subr.bf16.mxu0 0
        %699 = vmatpush1.bf16.msra.mxu0 %v624
        %700 = vmatprep.subr.bf16.mxu0 0
        %701 = vmatpush1.bf16.msra.mxu0 %v625
        %702 = vmatprep.subr.bf16.mxu0 0
        %703 = vmatpush1.bf16.msra.mxu0 %v626
        %704 = vmatprep.subr.bf16.mxu0 0
        %705 = vmatpush1.bf16.msra.mxu0 %v627
        %706 = vmatprep.subr.bf16.mxu0 0
        %707 = vmatpush1.bf16.msra.mxu0 %v628
        %708 = vmatprep.subr.bf16.mxu0 0
        %709 = vmatpush1.bf16.msra.mxu0 %v629
        %710 = vmatprep.subr.bf16.mxu0 0
        %711 = vmatpush1.bf16.msra.mxu0 %v630
        %712 = vmatprep.subr.bf16.mxu0 0
        %713 = vmatpush1.bf16.msra.mxu0 0
        %714 = vmatprep.subr.bf16.mxu0 0
        %715 = vmatpush1.bf16.msra.mxu0 0
        %716 = vmatprep.subr.bf16.mxu0 0
        %717 = vmatpush1.bf16.msra.mxu0 0
        %718 = vmatprep.subr.bf16.mxu0 0
        %719 = vmatpush1.bf16.msra.mxu0 0
        %720 = vmatprep.subr.bf16.mxu0 0
        %721 = vmatpush1.bf16.msra.mxu0 0
        %722 = vmatprep.subr.bf16.mxu0 0
        %723 = vmatpush1.bf16.msra.mxu0 0
        %724 = vmatprep.subr.bf16.mxu0 0
        %725 = vmatpush1.bf16.msra.mxu0 0
        %726 = vmatprep.subr.bf16.mxu0 0
        %727 = vmatpush1.bf16.msra.mxu0 0
        %728 = vmatprep.mubr.bf16.mxu0 0
        %729 = vmatmul.mubr.bf16.gmra.mrb[0].mxu0 %v456
        %v730 = vpop.f32.mrb[0].mxu0
        %v731 = vadd.f32 %v690, %v730
        %v732 = vpop.f32.mrb[0].mxu0
        %v733 = vpop.f32.mrb[0].mxu0
        %v734 = vadd.f32 %v693, %v733
        %v735 = vpop.f32.mrb[0].mxu0
        %736 = vdwg.mxu0
        %v737 = vpack.c.bf16 %v734, %v731
        %v739 = vunpack.c.l.b16 %v737
        %v740 = vunpack.c.h.b16 %v737
        %v741 = vpack.c.b16 %v739, %v739
        %v742 = vpack.c.b16 %v740, %v740
        %745 = vst [vmem:[%s362] sm:$0xf] %v741
        %746 = vst [vmem:[%s362 + $0x4] sm:$0xf] %v742
        %v747 = vadd.f32 %v731, %v734
        %v748 = vrot.slane %v747, 4
        %v749 = vadd.f32 %v747, %v748
        %v750 = vrot.slane %v749, 2
        %v751 = vadd.f32 %v749, %v750
        %v752 = vrot.slane %v751, 1
        %v753 = vadd.f32 %v751, %v752
        %754 = vst [vmem:[%s375] sm:$0x1] %v753
        %v755 = vmul.f32 %v731, %v731
        %v756 = vmul.f32 %v734, %v734
        %v757 = vadd.f32 %v755, %v756
        %v758 = vrot.slane %v757, 4
        %v759 = vadd.f32 %v757, %v758
        %v760 = vrot.slane %v759, 2
        %v761 = vadd.f32 %v759, %v760
        %v762 = vrot.slane %v761, 1
        %v763 = vadd.f32 %v761, %v762
        %764 = vst [vmem:[%s381] sm:$0x1] %v763
        %v765 = vld [vmem:[#allocation7] sm:$0xf]
        %v766 = vld [vmem:[#allocation7 + $0x4] sm:$0xf]
        %v767 = vld [vmem:[#allocation7 + $0x8] sm:$0xf]
        %v768 = vld [vmem:[#allocation7 + $0xc] sm:$0xf]
        %v769 = vld [vmem:[#allocation7 + $0x10] sm:$0xf]
        %v770 = vld [vmem:[#allocation7 + $0x14] sm:$0xf]
        %v771 = vld [vmem:[#allocation7 + $0x18] sm:$0xf]
        %v772 = vld [vmem:[#allocation7 + $0x1c] sm:$0xf]
        %v773 = vld [vmem:[#allocation7 + $0x20] sm:$0xf]
        %v774 = vld [vmem:[#allocation7 + $0x24] sm:$0xf]
        %v775 = vld [vmem:[#allocation7 + $0x28] sm:$0xf]
        %v776 = vld [vmem:[#allocation7 + $0x2c] sm:$0xf]
        %v777 = vld [vmem:[#allocation7 + $0x30] sm:$0xf]
        %v778 = vld [vmem:[#allocation7 + $0x34] sm:$0xf]
        %v779 = vld [vmem:[#allocation7 + $0x38] sm:$0xf]
        %v780 = vld [vmem:[#allocation7 + $0x3c] sm:$0xf]
        %v797 = vunpack.c.l.b16 %v765
        %v798 = vunpack.c.l.b16 %v766
        %v799 = vunpack.c.l.b16 %v767
        %v800 = vunpack.c.l.b16 %v768
        %v801 = vunpack.c.l.b16 %v769
        %v802 = vunpack.c.l.b16 %v770
        %v803 = vunpack.c.l.b16 %v771
        %v804 = vunpack.c.l.b16 %v772
        %v805 = vunpack.c.l.b16 %v773
        %v806 = vunpack.c.l.b16 %v774
        %v807 = vunpack.c.l.b16 %v775
        %v808 = vunpack.c.l.b16 %v776
        %v809 = vunpack.c.l.b16 %v777
        %v810 = vunpack.c.l.b16 %v778
        %v811 = vunpack.c.l.b16 %v779
        %v812 = vunpack.c.l.b16 %v780
        %v813 = vpack.c.b16 %v798, %v797
        %v814 = vpack.c.b16 %v800, %v799
        %v815 = vpack.c.b16 %v802, %v801
        %v816 = vpack.c.b16 %v804, %v803
        %v817 = vpack.c.b16 %v806, %v805
        %v818 = vpack.c.b16 %v808, %v807
        %v819 = vpack.c.b16 %v810, %v809
        %v820 = vpack.c.b16 %v812, %v811
        %829 = vmatprep.subr.bf16.mxu0 0
        %830 = vmatpush1.bf16.msra.mxu0 %v813
        %831 = vmatprep.subr.bf16.mxu0 0
        %832 = vmatpush1.bf16.msra.mxu0 %v814
        %833 = vmatprep.subr.bf16.mxu0 0
        %834 = vmatpush1.bf16.msra.mxu0 %v815
        %835 = vmatprep.subr.bf16.mxu0 0
        %836 = vmatpush1.bf16.msra.mxu0 %v816
        %837 = vmatprep.subr.bf16.mxu0 0
        %838 = vmatpush1.bf16.msra.mxu0 %v817
        %839 = vmatprep.subr.bf16.mxu0 0
        %840 = vmatpush1.bf16.msra.mxu0 %v818
        %841 = vmatprep.subr.bf16.mxu0 0
        %842 = vmatpush1.bf16.msra.mxu0 %v819
        %843 = vmatprep.subr.bf16.mxu0 0
        %844 = vmatpush1.bf16.msra.mxu0 %v820
        %845 = vmatprep.subr.bf16.mxu0 0
        %846 = vmatpush1.bf16.msra.mxu0 0
        %847 = vmatprep.subr.bf16.mxu0 0
        %848 = vmatpush1.bf16.msra.mxu0 0
        %849 = vmatprep.subr.bf16.mxu0 0
        %850 = vmatpush1.bf16.msra.mxu0 0
        %851 = vmatprep.subr.bf16.mxu0 0
        %852 = vmatpush1.bf16.msra.mxu0 0
        %853 = vmatprep.subr.bf16.mxu0 0
        %854 = vmatpush1.bf16.msra.mxu0 0
        %855 = vmatprep.subr.bf16.mxu0 0
        %856 = vmatpush1.bf16.msra.mxu0 0
        %857 = vmatprep.subr.bf16.mxu0 0
        %858 = vmatpush1.bf16.msra.mxu0 0
        %859 = vmatprep.subr.bf16.mxu0 0
        %860 = vmatpush1.bf16.msra.mxu0 0
        %861 = vmatprep.mubr.bf16.mxu0 0
        %862 = vmatmul.mubr.bf16.gmra.mrb[0].mxu0 %v461
        %v863 = vpop.f32.mrb[0].mxu0
        %v864 = vadd.f32 0.0, %v863
        %v865 = vpop.f32.mrb[0].mxu0
        %v866 = vpop.f32.mrb[0].mxu0
        %v867 = vadd.f32 0.0, %v866
        %v868 = vpop.f32.mrb[0].mxu0
        %869 = vdwg.mxu0
        %v870 = vpack.c.bf16 %v867, %v864
        %v872 = vunpack.c.l.b16 %v870
        %v873 = vunpack.c.h.b16 %v870
        %v874 = vpack.c.b16 %v872, %v872
        %v875 = vpack.c.b16 %v873, %v873
        %878 = vst [vmem:[%s369] sm:$0xf] %v874
        %879 = vst [vmem:[%s369 + $0x4] sm:$0xf] %v875
        %v880 = vadd.f32 %v864, %v867
        %v881 = vrot.slane %v880, 4
        %v882 = vadd.f32 %v880, %v881
        %v883 = vrot.slane %v882, 2
        %v884 = vadd.f32 %v882, %v883
        %v885 = vrot.slane %v884, 1
        %v886 = vadd.f32 %v884, %v885
        %887 = vst [vmem:[%s387] sm:$0x1] %v886
        %v888 = vmul.f32 %v864, %v864
        %v889 = vmul.f32 %v867, %v867
        %v890 = vadd.f32 %v888, %v889
        %v891 = vrot.slane %v890, 4
        %v892 = vadd.f32 %v890, %v891
        %v893 = vrot.slane %v892, 2
        %v894 = vadd.f32 %v892, %v893
        %v895 = vrot.slane %v894, 1
        %v896 = vadd.f32 %v894, %v895
        %897 = vst [vmem:[%s393] sm:$0x1] %v896
        %s898 = sand.u32 %s112, 1
        %s899 = scalar_lea.sflag [#allocation4], %s898
        %s900 = sand.u32 %s112, 1
        %s901 = smul.addr %s900, 8
        %s902 = scalar_lea.vmem [#allocation8], %s901
        %s903 = sand.u32 %s36, 1
        %s904 = scalar_lea.sflag [#allocation10], %s903
        %s905 = sand.u32 %s138, 1
        %s906 = smul.addr %s905, 8
        %s907 = scalar_lea.vmem [#allocation9], %s906
        %s908 = sand.u32 %s36, 1
        %s909 = scalar_lea.sflag [#allocation10], %s908
        %s910 = sand.u32 %s164, 1
        %s911 = scalar_lea.vmem [#allocation11], %s910
        %s912 = sand.u32 %s36, 1
        %s913 = scalar_lea.sflag [#allocation13], %s912
        %s914 = sand.u32 %s190, 1
        %s915 = scalar_lea.vmem [#allocation12], %s914
        %s916 = sand.u32 %s36, 1
        %s917 = scalar_lea.sflag [#allocation13], %s916
        %s918 = sand.u32 %s216, 1
        %s919 = scalar_lea.vmem [#allocation14], %s918
        %s920 = sand.u32 %s242, 1
        %s921 = scalar_lea.sflag [#allocation16], %s920
        %s922 = sand.u32 %s242, 1
        %s923 = scalar_lea.vmem [#allocation15], %s922
        // Predicated region
        $region45: #{tpu_custom_call.1} parent=31 // pred_check
          %p924 = pneg %p122
        $region46: #{tpu_custom_call.1} parent=31 // pred_check_branch
          %926 = sbr.rel (%p924) target = $region48
        $region47: #{tpu_custom_call.1} parent=31 // pred_region
          %s927 = smul.u32 2, %s36
          %s929 = ssub.s32 128, 128
          %930 = vsyncadd %s899, %s929
          %s931 = smul.addr %s927, 64
          %s932 = scalar_lea.hbm %s3, %s931
          %s933 = sshll.u32 %s902, 4
          %s934 = int_to_ptr.vmem [resolvable:$true] %s933
          %939 = dma.vmem_to_hbm [thread:$0]  %s934, 128, %s932, %s899, 64, 64, 4
        $region48: #{tpu_custom_call.1} parent=31 // pred_fallthru
          _
        // Predicated region
        $region49: #{tpu_custom_call.1} parent=31 // pred_check
          %p940 = pneg %p148
        $region50: #{tpu_custom_call.1} parent=31 // pred_check_branch
          %942 = sbr.rel (%p940) target = $region52
        $region51: #{tpu_custom_call.1} parent=31 // pred_region
          %s943 = smul.u32 2, %s36
          %s945 = ssub.s32 128, 128
          %946 = vsyncadd %s904, %s945
          %s947 = smul.addr %s943, 64
          %s948 = scalar_lea.hbm %s4, %s947
          %s949 = sshll.u32 %s907, 4
          %s950 = int_to_ptr.vmem [resolvable:$true] %s949
          %955 = dma.vmem_to_hbm [thread:$0]  %s950, 128, %s948, %s904, 64, 64, 4
        $region52: #{tpu_custom_call.1} parent=31 // pred_fallthru
          _
        // Predicated region
        $region53: #{tpu_custom_call.1} parent=31 // pred_check
          %p956 = pneg %p174
        $region54: #{tpu_custom_call.1} parent=31 // pred_check_branch
          %958 = sbr.rel (%p956) target = $region56
        $region55: #{tpu_custom_call.1} parent=31 // pred_region
          %s960 = ssub.s32 16, 16
          %961 = vsyncadd %s909, %s960
          %s962 = smul.addr %s36, 16
          %s963 = scalar_lea.hbm %s5, %s962
          %s965 = sshll.u32 %s911, 4
          %s966 = int_to_ptr.vmem [resolvable:$true] %s965
          %968 = dma.vmem_to_hbm [thread:$0]  %s966, 16, %s963, %s909
        $region56: #{tpu_custom_call.1} parent=31 // pred_fallthru
          _
        // Predicated region
        $region57: #{tpu_custom_call.1} parent=31 // pred_check
          %p969 = pneg %p200
        $region58: #{tpu_custom_call.1} parent=31 // pred_check_branch
          %971 = sbr.rel (%p969) target = $region60
        $region59: #{tpu_custom_call.1} parent=31 // pred_region
          %s973 = ssub.s32 16, 16
          %974 = vsyncadd %s913, %s973
          %s975 = smul.addr %s36, 16
          %s976 = scalar_lea.hbm %s6, %s975
          %s978 = sshll.u32 %s915, 4
          %s979 = int_to_ptr.vmem [resolvable:$true] %s978
          %981 = dma.vmem_to_hbm [thread:$0]  %s979, 16, %s976, %s913
        $region60: #{tpu_custom_call.1} parent=31 // pred_fallthru
          _
        // Predicated region
        $region61: #{tpu_custom_call.1} parent=31 // pred_check
          %p982 = pneg %p226
        $region62: #{tpu_custom_call.1} parent=31 // pred_check_branch
          %984 = sbr.rel (%p982) target = $region64
        $region63: #{tpu_custom_call.1} parent=31 // pred_region
          %s986 = ssub.s32 16, 16
          %987 = vsyncadd %s917, %s986
          %s988 = smul.addr %s36, 16
          %s989 = scalar_lea.hbm %s7, %s988
          %s991 = sshll.u32 %s919, 4
          %s992 = int_to_ptr.vmem [resolvable:$true] %s991
          %994 = dma.vmem_to_hbm [thread:$0]  %s992, 16, %s989, %s917
        $region64: #{tpu_custom_call.1} parent=31 // pred_fallthru
          _
        // Predicated region
        $region65: #{tpu_custom_call.1} parent=31 // pred_check
          %p995 = pneg %p252
        $region66: #{tpu_custom_call.1} parent=31 // pred_check_branch
          %997 = sbr.rel (%p995) target = $region68
        $region67: #{tpu_custom_call.1} parent=31 // pred_region
          %s999 = ssub.s32 16, 16
          %1000 = vsyncadd %s921, %s999
          %s1001 = smul.addr %s36, 16
          %s1002 = scalar_lea.hbm %s8, %s1001
          %s1004 = sshll.u32 %s923, 4
          %s1005 = int_to_ptr.vmem [resolvable:$true] %s1004
          %1007 = dma.vmem_to_hbm [thread:$0]  %s1005, 16, %s1002, %s921
        $region68: #{tpu_custom_call.1} parent=31 // pred_fallthru
          _
      $region32: #{tpu_custom_call.1} parent=5 // pred_fallthru
        _
      %p1008 = scmp.le.s32.totalorder 2, %s31
      // Predicated region
      $region69: #{tpu_custom_call.1} parent=5 // pred_check
        %p1009 = pneg %p1008
      $region70: #{tpu_custom_call.1} parent=5 // pred_check_branch
        %1011 = sbr.rel (%p1009) target = $region72
      $region71: #{tpu_custom_call.1} parent=5 // pred_region
        %s1012 = ssub.s32 %s31, 2
        // Predicated region
        $region73: #{tpu_custom_call.1} parent=71 // pred_check
          %p1013 = pneg %p128
        $region74: #{tpu_custom_call.1} parent=71 // pred_check_branch
          %1015 = sbr.rel (%p1013) target = $region76
        $region75: #{tpu_custom_call.1} parent=71 // pred_region
          %s1016 = sand.u32 %s113, 1
          %s1017 = scalar_lea.sflag [#allocation4], %s1016
          %s1018 = sand.u32 %s113, 1
          %s1019 = smul.addr %s1018, 8
          %s1020 = scalar_lea.vmem [#allocation8], %s1019
          %1021 = dma.done %s1017, 128
        $region76: #{tpu_custom_call.1} parent=71 // pred_fallthru
          _
        // Predicated region
        $region77: #{tpu_custom_call.1} parent=71 // pred_check
          %p1022 = pneg %p154
        $region78: #{tpu_custom_call.1} parent=71 // pred_check_branch
          %1024 = sbr.rel (%p1022) target = $region80
        $region79: #{tpu_custom_call.1} parent=71 // pred_region
          %s1025 = sand.u32 %s37, 1
          %s1026 = scalar_lea.sflag [#allocation10], %s1025
          %s1027 = sand.u32 %s139, 1
          %s1028 = smul.addr %s1027, 8
          %s1029 = scalar_lea.vmem [#allocation9], %s1028
          %1030 = dma.done %s1026, 128
        $region80: #{tpu_custom_call.1} parent=71 // pred_fallthru
          _
        // Predicated region
        $region81: #{tpu_custom_call.1} parent=71 // pred_check
          %p1031 = pneg %p180
        $region82: #{tpu_custom_call.1} parent=71 // pred_check_branch
          %1033 = sbr.rel (%p1031) target = $region84
        $region83: #{tpu_custom_call.1} parent=71 // pred_region
          %s1034 = sand.u32 %s37, 1
          %s1035 = scalar_lea.sflag [#allocation10], %s1034
          %s1036 = sand.u32 %s165, 1
          %s1037 = scalar_lea.vmem [#allocation11], %s1036
          %1038 = dma.done %s1035, 16
        $region84: #{tpu_custom_call.1} parent=71 // pred_fallthru
          _
        // Predicated region
        $region85: #{tpu_custom_call.1} parent=71 // pred_check
          %p1039 = pneg %p206
        $region86: #{tpu_custom_call.1} parent=71 // pred_check_branch
          %1041 = sbr.rel (%p1039) target = $region88
        $region87: #{tpu_custom_call.1} parent=71 // pred_region
          %s1042 = sand.u32 %s37, 1
          %s1043 = scalar_lea.sflag [#allocation13], %s1042
          %s1044 = sand.u32 %s191, 1
          %s1045 = scalar_lea.vmem [#allocation12], %s1044
          %1046 = dma.done %s1043, 16
        $region88: #{tpu_custom_call.1} parent=71 // pred_fallthru
          _
        // Predicated region
        $region89: #{tpu_custom_call.1} parent=71 // pred_check
          %p1047 = pneg %p232
        $region90: #{tpu_custom_call.1} parent=71 // pred_check_branch
          %1049 = sbr.rel (%p1047) target = $region92
        $region91: #{tpu_custom_call.1} parent=71 // pred_region
          %s1050 = sand.u32 %s37, 1
          %s1051 = scalar_lea.sflag [#allocation13], %s1050
          %s1052 = sand.u32 %s217, 1
          %s1053 = scalar_lea.vmem [#allocation14], %s1052
          %1054 = dma.done %s1051, 16
        $region92: #{tpu_custom_call.1} parent=71 // pred_fallthru
          _
        // Predicated region
        $region93: #{tpu_custom_call.1} parent=71 // pred_check
          %p1055 = pneg %p258
        $region94: #{tpu_custom_call.1} parent=71 // pred_check_branch
          %1057 = sbr.rel (%p1055) target = $region96
        $region95: #{tpu_custom_call.1} parent=71 // pred_region
          %s1058 = sand.u32 %s243, 1
          %s1059 = scalar_lea.sflag [#allocation16], %s1058
          %s1060 = sand.u32 %s243, 1
          %s1061 = scalar_lea.vmem [#allocation15], %s1060
          %1062 = dma.done %s1059, 16
        $region96: #{tpu_custom_call.1} parent=71 // pred_fallthru
          _
      $region72: #{tpu_custom_call.1} parent=5 // pred_fallthru
        _
    $region6: #{tpu_custom_call.1} parent=1 // loop_footer
      %s35 = sadd.s32 1, %s31
    $region7: #{tpu_custom_call.1} parent=1 // loop_footer_branch
      %30 = sbr.rel target = $region3
    $region8: #{tpu_custom_call.1} parent=1 // loop_exit
      _
    %1063 = vsyncpa [#allocation3], 1
    %s1064 = scalar_lea.sflag [#allocation3], 1
    %1065 = vsyncpa %s1064, 1
    %1066 = vsyncpa [#allocation6], 1
    %1067 = vsyncpa [#allocation4], 1
    %s1068 = scalar_lea.sflag [#allocation4], 1
    %1069 = vsyncpa %s1068, 1
    %1070 = vsyncpa [#allocation10], 1
    %s1071 = scalar_lea.sflag [#allocation10], 1
    %1072 = vsyncpa %s1071, 1
    %1073 = vsyncpa [#allocation13], 1
    %s1074 = scalar_lea.sflag [#allocation13], 1
    %1075 = vsyncpa %s1074, 1
    %1076 = vsyncpa [#allocation16], 1
    %s1077 = scalar_lea.sflag [#allocation16], 1
    %1078 = vsyncpa %s1077, 1

</llo_original>
